<compile_context>
chip_gen: v7x
topology: tpu7x:2x2x1
jax: 0.10.0
libtpu: 0.0.40
codegen_flags: <defaults>
</compile_context>

<pallas_src>
import jax
import jax.numpy as jnp
from jax.experimental import pallas as pl
from jax.experimental.pallas import tpu as pltpu

BN_EPS = 1e-5
HIDDEN_PAD = 128        # hidden 100 -> 128 (lane-dense)
CLASS_PAD = 128         # classes 10 -> 128 (lane-dense output, sliced in wrapper)
NEG_BIG = -1e30         # fill for padded class-logit lanes (exp underflows to 0)


def classifier_kernel(x_ref, w1_ref, b1_ref, w2_ref, b2_ref, w3_ref, b3_ref, o_ref):
    """One batch tile: 3 single-pass bf16 MXU matmuls (f32 accum) + ReLU + log-softmax.

    BatchNorm is pre-folded into the Linear weights/biases; Dropout is the
    eval-mode identity, so nothing else is needed in the body.
    """
    x = x_ref[...]                                             # (tb, 800) bf16

    # Linear 1 (BN folded) + ReLU   [Dropout == identity in eval mode]
    h = jnp.dot(x, w1_ref[...], preferred_element_type=jnp.float32)
    h = jnp.maximum(h + b1_ref[...], 0.0)

    # Linear 2 (BN folded) + ReLU
    h = jnp.dot(h.astype(jnp.bfloat16), w2_ref[...],
                preferred_element_type=jnp.float32)
    h = jnp.maximum(h + b2_ref[...], 0.0)

    # Linear 3 + LogSoftmax (padded class lanes carry a -1e30 bias -> exp == 0)
    logits = jnp.dot(h.astype(jnp.bfloat16), w3_ref[...],
                     preferred_element_type=jnp.float32)
    logits = logits + b3_ref[...]
    m = jnp.max(logits, axis=1, keepdims=True)
    z = logits - m
    lse = jnp.log(jnp.sum(jnp.exp(z), axis=1, keepdims=True))
    o_ref[...] = (z - lse).astype(o_ref.dtype)


def _round_up(n, m):
    return ((n + m - 1) // m) * m


def _choose_tile(batch, block_b):
    """Batch-tile rows: multiple of 8 sublanes, capped at block_b, and — when the
    batch is big enough — small enough that the grid has >= 2 tiles so the
    "parallel" batch axis shards across both v7x TensorCores."""
    tb = min(block_b, _round_up(batch, 8))
    if batch > 8:
        tb = min(tb, _round_up(-(-batch // 2), 8))
    return max(tb, 8)


def fold_and_pad_params(p, hidden_pad=HIDDEN_PAD, class_pad=CLASS_PAD):
    """Fold inference-mode BatchNorm into the preceding Linear, zero-pad the
    feature dims to lane multiples (hidden 100->128, classes 10->128) and cast
    the weights to bf16 (biases stay f32; they add into the f32 accumulator)."""

    def fold(w, b, g, be, rm, rv):
        scale = g / jnp.sqrt(rv + BN_EPS)            # (1, H)
        return w * scale, (b - rm) * scale + be      # exact for eval-mode BN

    w1, b1 = fold(p["w1"], p["b1"], p["g1"], p["be1"], p["rm1"], p["rv1"])
    w2, b2 = fold(p["w2"], p["b2"], p["g2"], p["be2"], p["rm2"], p["rv2"])
    w3, b3 = p["w3"], p["b3"]

    in_dim, h = w1.shape
    c = w3.shape[1]
    hp, cp = hidden_pad, class_pad

    w1p = jnp.zeros((in_dim, hp), jnp.float32).at[:, :h].set(w1).astype(jnp.bfloat16)
    b1p = jnp.zeros((1, hp), jnp.float32).at[:, :h].set(b1)
    w2p = jnp.zeros((hp, hp), jnp.float32).at[:h, :h].set(w2).astype(jnp.bfloat16)
    b2p = jnp.zeros((1, hp), jnp.float32).at[:, :h].set(b2)
    w3p = jnp.zeros((hp, cp), jnp.float32).at[:h, :c].set(w3).astype(jnp.bfloat16)
    b3p = jnp.full((1, cp), NEG_BIG, jnp.float32).at[:, :c].set(b3)

    return {"w1": w1p, "b1": b1p, "w2": w2p, "b2": b2p, "w3": w3p, "b3": b3p}


def classifier_forward(x, fp, *, num_classes=10, block_b=2048):
    """Batch-tiled Pallas forward.  x: (B, input_size) f32 -> (B, num_classes) f32."""
    B, in_dim = x.shape
    hp = fp["w1"].shape[1]
    cp = fp["w3"].shape[1]

    tb = _choose_tile(B, block_b)
    bp = _round_up(B, tb)

    x = x.astype(jnp.bfloat16)             # halve the dominant HBM stream
    if bp != B:
        x = jnp.pad(x, ((0, bp - B), (0, 0)))
    grid = (bp // tb,)

    def resident(shape):
        return pl.BlockSpec(shape, lambda i: (0, 0))   # stays in VMEM across the grid

    out_padded = pl.pallas_call(
        classifier_kernel,
        out_shape=jax.ShapeDtypeStruct((bp, cp), jnp.float32),
        grid=grid,
        in_specs=[
            pl.BlockSpec((tb, in_dim), lambda i: (i, 0)),   # streamed bf16 input tile
            resident((in_dim, hp)), resident((1, hp)),      # Linear1 (BN-folded)
            resident((hp, hp)), resident((1, hp)),          # Linear2 (BN-folded)
            resident((hp, cp)), resident((1, cp)),          # Linear3
        ],
        out_specs=pl.BlockSpec((tb, cp), lambda i: (i, 0)),  # lane-dense (128-wide)
        compiler_params=pltpu.CompilerParams(
            dimension_semantics=("parallel",),               # megacore sharding on v7x
            vmem_limit_bytes=48 * 1024 * 1024,               # fits tb=2048 everywhere
        ),
    )(x, fp["w1"], fp["b1"], fp["w2"], fp["b2"], fp["w3"], fp["b3"])

    return out_padded[:B, :num_classes]


def init_params(key, input_size=50 * 4 * 4, hidden=100, num_classes=10):
    ks = jax.random.split(key, 14)

    def linear_init(kw, kb, fan_in, fan_out):
        bound = 1.0 / jnp.sqrt(fan_in)
        w = jax.random.uniform(kw, (fan_in, fan_out), jnp.float32, -bound, bound)
        b = jax.random.uniform(kb, (1, fan_out), jnp.float32, -bound, bound)
        return w, b

    def bn_init(kg, kb, km, kv, n):
        g = jax.random.uniform(kg, (1, n), jnp.float32, 0.5, 1.5)
        be = 0.1 * jax.random.normal(kb, (1, n), jnp.float32)
        rm = 0.1 * jax.random.normal(km, (1, n), jnp.float32)
        rv = jax.random.uniform(kv, (1, n), jnp.float32, 0.5, 1.5)
        return g, be, rm, rv

    w1, b1 = linear_init(ks[0], ks[1], input_size, hidden)
    g1, be1, rm1, rv1 = bn_init(ks[2], ks[3], ks[4], ks[5], hidden)
    w2, b2 = linear_init(ks[6], ks[7], hidden, hidden)
    g2, be2, rm2, rv2 = bn_init(ks[8], ks[9], ks[10], ks[11], hidden)
    w3, b3 = linear_init(ks[12], ks[13], hidden, num_classes)

    return {
        "w1": w1, "b1": b1, "g1": g1, "be1": be1, "rm1": rm1, "rv1": rv1,
        "w2": w2, "b2": b2, "g2": g2, "be2": be2, "rm2": rm2, "rv2": rv2,
        "w3": w3, "b3": b3,
    }


def reference_forward(x, p):
    """Pure-JAX f32 reference (eval-mode BN / identity Dropout)."""
    prec = jax.lax.Precision.HIGHEST

    def bn(h, g, be, rm, rv):
        return (h - rm) * (g / jnp.sqrt(rv + BN_EPS)) + be

    h = jnp.dot(x, p["w1"], precision=prec) + p["b1"]
    h = jnp.maximum(bn(h, p["g1"], p["be1"], p["rm1"], p["rv1"]), 0.0)
    h = jnp.dot(h, p["w2"], precision=prec) + p["b2"]
    h = jnp.maximum(bn(h, p["g2"], p["be2"], p["rm2"], p["rv2"]), 0.0)
    logits = jnp.dot(h, p["w3"], precision=prec) + p["b3"]
    return jax.nn.log_softmax(logits, axis=1)


if __name__ == "__main__":
    key = jax.random.PRNGKey(0)
    k_x, k_p = jax.random.split(key)

    B, INPUT_SIZE = 8, 50 * 4 * 4   # input_size implied by the module default
    x = jax.random.normal(k_x, (B, INPUT_SIZE), jnp.float32)
    params = init_params(k_p, input_size=INPUT_SIZE)
    folded = fold_and_pad_params(params)

    # Tolerance is loosened vs the f32 HIGHEST reference because the kernel
    # streams bf16 activations/weights (a test artifact, not a numerical bug).
    ATOL = RTOL = 5e-2

    # Small-batch check (single grid step).
    out = jax.block_until_ready(classifier_forward(x, folded))
    ref = reference_forward(x, params)
    assert out.shape == (B, 10)
    assert jnp.allclose(out, ref, atol=ATOL, rtol=RTOL), "mismatch vs JAX reference (B=8)"

    # Multi-tile check: grid > 1, batch padded to a tile multiple.
    B2 = 300
    x2 = jax.random.normal(k_x, (B2, INPUT_SIZE), jnp.float32)
    out2 = jax.block_until_ready(classifier_forward(x2, folded, block_b=128))
    ref2 = reference_forward(x2, params)
    assert out2.shape == (B2, 10)
    assert jnp.allclose(out2, ref2, atol=ATOL, rtol=RTOL), "mismatch vs JAX reference (B=300)"

    print("KERNEL_OK")
</pallas_src>

<mosaic_0001>
module attributes {stable_mosaic.version = 11 : i64} {
  func.func @classifier_kernel(%arg0: i32, %arg1: memref<8x800xbf16, #tpu.memory_space<vmem>>, %arg2: memref<800x128xbf16, #tpu.memory_space<vmem>>, %arg3: memref<1x128xf32, #tpu.memory_space<vmem>>, %arg4: memref<128x128xbf16, #tpu.memory_space<vmem>>, %arg5: memref<1x128xf32, #tpu.memory_space<vmem>>, %arg6: memref<128x128xbf16, #tpu.memory_space<vmem>>, %arg7: memref<1x128xf32, #tpu.memory_space<vmem>>, %arg8: memref<8x128xf32, #tpu.memory_space<vmem>>) attributes {dimension_semantics = [#tpu.dimension_semantics<parallel>], iteration_bounds = array<i64: 1>, scalar_prefetch = 0 : i64, scratch_operands = 0 : i64, tpu.core_type = #tpu.core_type<tc>, window_params = [{transform_indices = @transform_0, window_bounds = array<i64: 8, 800>}, {pipeline_mode = #tpu.pipeline_mode<synchronous>, transform_indices = @transform_1, window_bounds = array<i64: 800, 128>}, {pipeline_mode = #tpu.pipeline_mode<synchronous>, transform_indices = @transform_2, window_bounds = array<i64: 1, 128>}, {pipeline_mode = #tpu.pipeline_mode<synchronous>, transform_indices = @transform_3, window_bounds = array<i64: 128, 128>}, {pipeline_mode = #tpu.pipeline_mode<synchronous>, transform_indices = @transform_4, window_bounds = array<i64: 1, 128>}, {pipeline_mode = #tpu.pipeline_mode<synchronous>, transform_indices = @transform_5, window_bounds = array<i64: 128, 128>}, {pipeline_mode = #tpu.pipeline_mode<synchronous>, transform_indices = @transform_6, window_bounds = array<i64: 1, 128>}, {transform_indices = @transform_7, window_bounds = array<i64: 8, 128>}]} {
    %c0 = arith.constant 0 : index
    %c0_0 = arith.constant 0 : index
    %0 = vector.load %arg1[%c0, %c0_0] : memref<8x800xbf16, #tpu.memory_space<vmem>>, vector<8x800xbf16>
    %c0_1 = arith.constant 0 : index
    %c0_2 = arith.constant 0 : index
    %1 = vector.load %arg2[%c0_1, %c0_2] : memref<800x128xbf16, #tpu.memory_space<vmem>>, vector<800x128xbf16>
    %cst = arith.constant dense<0.000000e+00> : vector<8x128xf32>
    %2 = tpu.matmul %0, %1, %cst {dimension_numbers = #tpu.dot_dimension_numbers<[1], [0], [0], [1], [0, 0, 1, 1], [], []>} : vector<8x800xbf16>, vector<800x128xbf16>, vector<8x128xf32> -> vector<8x128xf32>
    %c0_3 = arith.constant 0 : index
    %c0_4 = arith.constant 0 : index
    %3 = vector.load %arg3[%c0_3, %c0_4] : memref<1x128xf32, #tpu.memory_space<vmem>>, vector<1x128xf32>
    %4 = vector.broadcast %3 : vector<1x128xf32> to vector<8x128xf32>
    %5 = arith.addf %2, %4 : vector<8x128xf32>
    %cst_5 = arith.constant 0.000000e+00 : f32
    %6 = vector.broadcast %cst_5 : f32 to vector<8x128xf32>
    %7 = arith.maximumf %5, %6 : vector<8x128xf32>
    %8 = arith.truncf %7 : vector<8x128xf32> to vector<8x128xbf16>
    %c0_6 = arith.constant 0 : index
    %c0_7 = arith.constant 0 : index
    %9 = vector.load %arg4[%c0_6, %c0_7] : memref<128x128xbf16, #tpu.memory_space<vmem>>, vector<128x128xbf16>
    %cst_8 = arith.constant dense<0.000000e+00> : vector<8x128xf32>
    %10 = tpu.matmul %8, %9, %cst_8 {dimension_numbers = #tpu.dot_dimension_numbers<[1], [0], [0], [1], [0, 0, 1, 1], [], []>} : vector<8x128xbf16>, vector<128x128xbf16>, vector<8x128xf32> -> vector<8x128xf32>
    %c0_9 = arith.constant 0 : index
    %c0_10 = arith.constant 0 : index
    %11 = vector.load %arg5[%c0_9, %c0_10] : memref<1x128xf32, #tpu.memory_space<vmem>>, vector<1x128xf32>
    %12 = vector.broadcast %11 : vector<1x128xf32> to vector<8x128xf32>
    %13 = arith.addf %10, %12 : vector<8x128xf32>
    %cst_11 = arith.constant 0.000000e+00 : f32
    %14 = vector.broadcast %cst_11 : f32 to vector<8x128xf32>
    %15 = arith.maximumf %13, %14 : vector<8x128xf32>
    %16 = arith.truncf %15 : vector<8x128xf32> to vector<8x128xbf16>
    %c0_12 = arith.constant 0 : index
    %c0_13 = arith.constant 0 : index
    %17 = vector.load %arg6[%c0_12, %c0_13] : memref<128x128xbf16, #tpu.memory_space<vmem>>, vector<128x128xbf16>
    %cst_14 = arith.constant dense<0.000000e+00> : vector<8x128xf32>
    %18 = tpu.matmul %16, %17, %cst_14 {dimension_numbers = #tpu.dot_dimension_numbers<[1], [0], [0], [1], [0, 0, 1, 1], [], []>} : vector<8x128xbf16>, vector<128x128xbf16>, vector<8x128xf32> -> vector<8x128xf32>
    %c0_15 = arith.constant 0 : index
    %c0_16 = arith.constant 0 : index
    %19 = vector.load %arg7[%c0_15, %c0_16] : memref<1x128xf32, #tpu.memory_space<vmem>>, vector<1x128xf32>
    %20 = vector.broadcast %19 : vector<1x128xf32> to vector<8x128xf32>
    %21 = arith.addf %18, %20 : vector<8x128xf32>
    %cst_17 = arith.constant dense<0xFF800000> : vector<8xf32>
    %22 = vector.multi_reduction <maximumf>, %21, %cst_17 [1] : vector<8x128xf32> to vector<8xf32>
    %23 = vector.shape_cast %22 : vector<8xf32> to vector<8x1xf32>
    %24 = vector.broadcast %23 : vector<8x1xf32> to vector<8x128xf32>
    %25 = arith.subf %21, %24 : vector<8x128xf32>
    %26 = math.exp %25 : vector<8x128xf32>
    %cst_18 = arith.constant dense<0.000000e+00> : vector<8xf32>
    %27 = vector.multi_reduction <add>, %26, %cst_18 [1] : vector<8x128xf32> to vector<8xf32>
    %28 = vector.shape_cast %27 : vector<8xf32> to vector<8x1xf32>
    %29 = math.log %28 : vector<8x1xf32>
    %30 = vector.broadcast %29 : vector<8x1xf32> to vector<8x128xf32>
    %31 = arith.subf %25, %30 : vector<8x128xf32>
    %c0_19 = arith.constant 0 : index
    %c0_20 = arith.constant 0 : index
    %32 = vector.load %arg8[%c0_19, %c0_20] : memref<8x128xf32, #tpu.memory_space<vmem>>, vector<8x128xf32>
    tpu.vector_store %arg8[%c0_19, %c0_20], %31 {strides = array<i32>} : memref<8x128xf32, #tpu.memory_space<vmem>>, vector<8x128xf32>,
    return
  }
  func.func @transform_0(%arg0: i32) -> (i32, i32) {
    %c0_i32 = arith.constant 0 : i32
    %c0_i32_0 = arith.constant 0 : i32
    return %arg0, %c0_i32 : i32, i32
  }
  func.func @transform_1(%arg0: i32) -> (i32, i32) {
    %c0_i32 = arith.constant 0 : i32
    %c0_i32_0 = arith.constant 0 : i32
    %c0_i32_1 = arith.constant 0 : i32
    return %c0_i32, %c0_i32_0 : i32, i32
  }
  func.func @transform_2(%arg0: i32) -> (i32, i32) {
    %c0_i32 = arith.constant 0 : i32
    %c0_i32_0 = arith.constant 0 : i32
    %c0_i32_1 = arith.constant 0 : i32
    return %c0_i32, %c0_i32_0 : i32, i32
  }
  func.func @transform_3(%arg0: i32) -> (i32, i32) {
    %c0_i32 = arith.constant 0 : i32
    %c0_i32_0 = arith.constant 0 : i32
    %c0_i32_1 = arith.constant 0 : i32
    return %c0_i32, %c0_i32_0 : i32, i32
  }
  func.func @transform_4(%arg0: i32) -> (i32, i32) {
    %c0_i32 = arith.constant 0 : i32
    %c0_i32_0 = arith.constant 0 : i32
    %c0_i32_1 = arith.constant 0 : i32
    return %c0_i32, %c0_i32_0 : i32, i32
  }
  func.func @transform_5(%arg0: i32) -> (i32, i32) {
    %c0_i32 = arith.constant 0 : i32
    %c0_i32_0 = arith.constant 0 : i32
    %c0_i32_1 = arith.constant 0 : i32
    return %c0_i32, %c0_i32_0 : i32, i32
  }
  func.func @transform_6(%arg0: i32) -> (i32, i32) {
    %c0_i32 = arith.constant 0 : i32
    %c0_i32_0 = arith.constant 0 : i32
    %c0_i32_1 = arith.constant 0 : i32
    return %c0_i32, %c0_i32_0 : i32, i32
  }
  func.func @transform_7(%arg0: i32) -> (i32, i32) {
    %c0_i32 = arith.constant 0 : i32
    %c0_i32_0 = arith.constant 0 : i32
    return %arg0, %c0_i32 : i32, i32
  }
}

</mosaic_0001>

<llo_original>
// kernel: tpu_custom_call.1
$region0: #{tpu_custom_call.1}
  #allocation0 [shape = 'u32[]', space=smem, size = 0x4, offset = 0x4, fixed_abs, tag = 'smem constant byte address 0x4 - core index']
  #allocation1 [shape = 'u32[144,128]{1,0:T(1,128)}', space=vmem, size = 0x12000, scoped, tag = 'internal scratch']
  %s0 = inlined_call_operand.hbm [shape: bf16[8,800], index: 0, kind: input, shape index: {}]
  %s1 = inlined_call_operand.hbm [shape: bf16[800,128], index: 1, kind: input, shape index: {}]
  %s2 = inlined_call_operand.vmem [shape: f32[1,128], index: 2, kind: input, shape index: {}]
  %s3 = inlined_call_operand.hbm [shape: bf16[128,128], index: 3, kind: input, shape index: {}]
  %s4 = inlined_call_operand.vmem [shape: f32[1,128], index: 4, kind: input, shape index: {}]
  %s5 = inlined_call_operand.hbm [shape: bf16[128,128], index: 5, kind: input, shape index: {}]
  %s6 = inlined_call_operand.vmem [shape: f32[1,128], index: 6, kind: input, shape index: {}]
  %s7 = inlined_call_operand.hbm [shape: f32[8,128], index: 7, kind: output, shape index: {}]
  %s8 = sld [smem:[#allocation0]]
  $region54: #{tpu_custom_call.1} parent=0
    _
  %s10 = ssub.s32 1, %s8
  %s11 = scalar_select 0, %s10, %s8
  $region1: #{tpu_custom_call.1} parent=0
    #allocation2 [shape = 'u8[14336]{0}', space=vmem, size = 0x3800, scoped, tag = 'input window, operand 0, single buffered']
    #allocation3 [shape = 's32[1]{0}', space=sflag, size = 0x4, scoped, tag = 'scoped memory for tpu_custom_call.1']
    #allocation4 [shape = 's32[1]{0}', space=sflag, size = 0x4, scoped, tag = 'scoped memory for tpu_custom_call.1']
    #allocation5 [shape = 'u8[204800]{0}', space=vmem, size = 0x32000, scoped, tag = 'input window, operand 1, single buffered']
    #allocation6 [shape = 's32[1]{0}', space=sflag, size = 0x4, scoped, tag = 'scoped memory for tpu_custom_call.1']
    #allocation7 [shape = 'u8[32768]{0}', space=vmem, size = 0x8000, scoped, tag = 'input window, operand 3, single buffered']
    #allocation8 [shape = 'u8[32768]{0}', space=vmem, size = 0x8000, scoped, tag = 'input window, operand 5, single buffered']
    #allocation9 [shape = 's32[1]{0}', space=sflag, size = 0x4, scoped, tag = 'scoped memory for tpu_custom_call.1']
    #allocation10 [shape = 'u8[4096]{0}', space=vmem, size = 0x1000, scoped, tag = 'output window, operand 0, single buffered']
    %12 = vsyncpa [#allocation3], 0
    %13 = vsyncpa [#allocation6], 0
    %14 = vsyncpa [#allocation9], 0
    %15 = vsyncpa [#allocation4], 0
    // Predicated region
    $region2: #{tpu_custom_call.1} parent=1 // pred_check
      _
    $region3: #{tpu_custom_call.1} parent=1 // pred_check_branch
      %17 = sbr.rel (0) target = $region5
    $region4: #{tpu_custom_call.1} parent=1 // pred_region
      %s19 = ssub.s32 448, 448
      %20 = vsyncadd [#allocation3], %s19
      %s22 = sshll.u32 [#allocation2], 4
      %s23 = int_to_ptr.vmem [resolvable:$true] %s22
      %25 = dma.hbm_to_vmem [thread:$0]  %s0, 448, %s23, [#allocation3]
    $region5: #{tpu_custom_call.1} parent=1 // pred_fallthru
      _
    // Predicated region
    $region6: #{tpu_custom_call.1} parent=1 // pred_check
      _
    $region7: #{tpu_custom_call.1} parent=1 // pred_check_branch
      %27 = sbr.rel (0) target = $region9
    $region8: #{tpu_custom_call.1} parent=1 // pred_region
      %s29 = ssub.s32 6400, 6400
      %30 = vsyncadd [#allocation6], %s29
      %s31 = sshll.u32 [#allocation5], 4
      %s32 = int_to_ptr.vmem [resolvable:$true] %s31
      %37 = dma.hbm_to_vmem [thread:$0]  %s1, 6400, %s32, [#allocation6], 64, 64, 4
    $region9: #{tpu_custom_call.1} parent=1 // pred_fallthru
      _
    // Predicated region
    $region10: #{tpu_custom_call.1} parent=1 // pred_check
      _
    $region11: #{tpu_custom_call.1} parent=1 // pred_check_branch
      %39 = sbr.rel (0) target = $region13
    $region12: #{tpu_custom_call.1} parent=1 // pred_region
      _
    $region13: #{tpu_custom_call.1} parent=1 // pred_fallthru
      _
    // Predicated region
    $region14: #{tpu_custom_call.1} parent=1 // pred_check
      _
    $region15: #{tpu_custom_call.1} parent=1 // pred_check_branch
      %41 = sbr.rel (0) target = $region17
    $region16: #{tpu_custom_call.1} parent=1 // pred_region
      %s43 = ssub.s32 1024, 1024
      %44 = vsyncadd [#allocation6], %s43
      %s45 = sshll.u32 [#allocation7], 4
      %s46 = int_to_ptr.vmem [resolvable:$true] %s45
      %51 = dma.hbm_to_vmem [thread:$0]  %s3, 1024, %s46, [#allocation6], 64, 64, 4
    $region17: #{tpu_custom_call.1} parent=1 // pred_fallthru
      _
    // Predicated region
    $region18: #{tpu_custom_call.1} parent=1 // pred_check
      _
    $region19: #{tpu_custom_call.1} parent=1 // pred_check_branch
      %53 = sbr.rel (0) target = $region21
    $region20: #{tpu_custom_call.1} parent=1 // pred_region
      _
    $region21: #{tpu_custom_call.1} parent=1 // pred_fallthru
      _
    // Predicated region
    $region22: #{tpu_custom_call.1} parent=1 // pred_check
      _
    $region23: #{tpu_custom_call.1} parent=1 // pred_check_branch
      %55 = sbr.rel (0) target = $region25
    $region24: #{tpu_custom_call.1} parent=1 // pred_region
      %s57 = ssub.s32 1024, 1024
      %58 = vsyncadd [#allocation9], %s57
      %s59 = sshll.u32 [#allocation8], 4
      %s60 = int_to_ptr.vmem [resolvable:$true] %s59
      %65 = dma.hbm_to_vmem [thread:$0]  %s5, 1024, %s60, [#allocation9], 64, 64, 4
    $region25: #{tpu_custom_call.1} parent=1 // pred_fallthru
      _
    // Predicated region
    $region26: #{tpu_custom_call.1} parent=1 // pred_check
      _
    $region27: #{tpu_custom_call.1} parent=1 // pred_check_branch
      %67 = sbr.rel (0) target = $region29
    $region28: #{tpu_custom_call.1} parent=1 // pred_region
      _
    $region29: #{tpu_custom_call.1} parent=1 // pred_fallthru
      _
    // Predicated region
    $region30: #{tpu_custom_call.1} parent=1 // pred_check
      _
    $region31: #{tpu_custom_call.1} parent=1 // pred_check_branch
      %69 = sbr.rel (0) target = $region33
    $region32: #{tpu_custom_call.1} parent=1 // pred_region
      %70 = dma.done [#allocation3], 448
    $region33: #{tpu_custom_call.1} parent=1 // pred_fallthru
      _
    // Predicated region
    $region34: #{tpu_custom_call.1} parent=1 // pred_check
      _
    $region35: #{tpu_custom_call.1} parent=1 // pred_check_branch
      %72 = sbr.rel (0) target = $region37
    $region36: #{tpu_custom_call.1} parent=1 // pred_region
      %73 = dma.done [#allocation6], 6400
    $region37: #{tpu_custom_call.1} parent=1 // pred_fallthru
      _
    // Predicated region
    $region38: #{tpu_custom_call.1} parent=1 // pred_check
      _
    $region39: #{tpu_custom_call.1} parent=1 // pred_check_branch
      %75 = sbr.rel (0) target = $region41
    $region40: #{tpu_custom_call.1} parent=1 // pred_region
      %76 = dma.done [#allocation6], 1024
    $region41: #{tpu_custom_call.1} parent=1 // pred_fallthru
      _
    // Predicated region
    $region42: #{tpu_custom_call.1} parent=1 // pred_check
      _
    $region43: #{tpu_custom_call.1} parent=1 // pred_check_branch
      %78 = sbr.rel (0) target = $region45
    $region44: #{tpu_custom_call.1} parent=1 // pred_region
      %79 = dma.done [#allocation9], 1024
    $region45: #{tpu_custom_call.1} parent=1 // pred_fallthru
      _
    %v81 = vld [vmem:[#allocation2] sm:$0xff]
    %v82 = vld [vmem:[#allocation2 + $0x8] sm:$0xff]
    %v83 = vld [vmem:[#allocation2 + $0x10] sm:$0xff]
    %v84 = vld [vmem:[#allocation2 + $0x18] sm:$0xf]
    %v85 = vld [vmem:[#allocation5] sm:$0xf]
    %v86 = vld [vmem:[#allocation5 + $0x4] sm:$0xf]
    %v87 = vld [vmem:[#allocation5 + $0x8] sm:$0xf]
    %v88 = vld [vmem:[#allocation5 + $0xc] sm:$0xf]
    %v89 = vld [vmem:[#allocation5 + $0x10] sm:$0xf]
    %v90 = vld [vmem:[#allocation5 + $0x14] sm:$0xf]
    %v91 = vld [vmem:[#allocation5 + $0x18] sm:$0xf]
    %v92 = vld [vmem:[#allocation5 + $0x1c] sm:$0xf]
    %v93 = vld [vmem:[#allocation5 + $0x20] sm:$0xf]
    %v94 = vld [vmem:[#allocation5 + $0x24] sm:$0xf]
    %v95 = vld [vmem:[#allocation5 + $0x28] sm:$0xf]
    %v96 = vld [vmem:[#allocation5 + $0x2c] sm:$0xf]
    %v97 = vld [vmem:[#allocation5 + $0x30] sm:$0xf]
    %v98 = vld [vmem:[#allocation5 + $0x34] sm:$0xf]
    %v99 = vld [vmem:[#allocation5 + $0x38] sm:$0xf]
    %v100 = vld [vmem:[#allocation5 + $0x3c] sm:$0xf]
    %v101 = vld [vmem:[#allocation5 + $0x40] sm:$0xf]
    %v102 = vld [vmem:[#allocation5 + $0x44] sm:$0xf]
    %v103 = vld [vmem:[#allocation5 + $0x48] sm:$0xf]
    %v104 = vld [vmem:[#allocation5 + $0x4c] sm:$0xf]
    %v105 = vld [vmem:[#allocation5 + $0x50] sm:$0xf]
    %v106 = vld [vmem:[#allocation5 + $0x54] sm:$0xf]
    %v107 = vld [vmem:[#allocation5 + $0x58] sm:$0xf]
    %v108 = vld [vmem:[#allocation5 + $0x5c] sm:$0xf]
    %v109 = vld [vmem:[#allocation5 + $0x60] sm:$0xf]
    %v110 = vld [vmem:[#allocation5 + $0x64] sm:$0xf]
    %v111 = vld [vmem:[#allocation5 + $0x68] sm:$0xf]
    %v112 = vld [vmem:[#allocation5 + $0x6c] sm:$0xf]
    %v113 = vld [vmem:[#allocation5 + $0x70] sm:$0xf]
    %v114 = vld [vmem:[#allocation5 + $0x74] sm:$0xf]
    %v115 = vld [vmem:[#allocation5 + $0x78] sm:$0xf]
    %v116 = vld [vmem:[#allocation5 + $0x7c] sm:$0xf]
    %v117 = vld [vmem:[#allocation5 + $0x80] sm:$0xf]
    %v118 = vld [vmem:[#allocation5 + $0x84] sm:$0xf]
    %v119 = vld [vmem:[#allocation5 + $0x88] sm:$0xf]
    %v120 = vld [vmem:[#allocation5 + $0x8c] sm:$0xf]
    %v121 = vld [vmem:[#allocation5 + $0x90] sm:$0xf]
    %v122 = vld [vmem:[#allocation5 + $0x94] sm:$0xf]
    %v123 = vld [vmem:[#allocation5 + $0x98] sm:$0xf]
    %v124 = vld [vmem:[#allocation5 + $0x9c] sm:$0xf]
    %v125 = vld [vmem:[#allocation5 + $0xa0] sm:$0xf]
    %v126 = vld [vmem:[#allocation5 + $0xa4] sm:$0xf]
    %v127 = vld [vmem:[#allocation5 + $0xa8] sm:$0xf]
    %v128 = vld [vmem:[#allocation5 + $0xac] sm:$0xf]
    %v129 = vld [vmem:[#allocation5 + $0xb0] sm:$0xf]
    %v130 = vld [vmem:[#allocation5 + $0xb4] sm:$0xf]
    %v131 = vld [vmem:[#allocation5 + $0xb8] sm:$0xf]
    %v132 = vld [vmem:[#allocation5 + $0xbc] sm:$0xf]
    %v133 = vld [vmem:[#allocation5 + $0xc0] sm:$0xf]
    %v134 = vld [vmem:[#allocation5 + $0xc4] sm:$0xf]
    %v135 = vld [vmem:[#allocation5 + $0xc8] sm:$0xf]
    %v136 = vld [vmem:[#allocation5 + $0xcc] sm:$0xf]
    %v137 = vld [vmem:[#allocation5 + $0xd0] sm:$0xf]
    %v138 = vld [vmem:[#allocation5 + $0xd4] sm:$0xf]
    %v139 = vld [vmem:[#allocation5 + $0xd8] sm:$0xf]
    %v140 = vld [vmem:[#allocation5 + $0xdc] sm:$0xf]
    %v141 = vld [vmem:[#allocation5 + $0xe0] sm:$0xf]
    %v142 = vld [vmem:[#allocation5 + $0xe4] sm:$0xf]
    %v143 = vld [vmem:[#allocation5 + $0xe8] sm:$0xf]
    %v144 = vld [vmem:[#allocation5 + $0xec] sm:$0xf]
    %v145 = vld [vmem:[#allocation5 + $0xf0] sm:$0xf]
    %v146 = vld [vmem:[#allocation5 + $0xf4] sm:$0xf]
    %v147 = vld [vmem:[#allocation5 + $0xf8] sm:$0xf]
    %v148 = vld [vmem:[#allocation5 + $0xfc] sm:$0xf]
    %v149 = vld [vmem:[#allocation5 + $0x100] sm:$0xf]
    %v150 = vld [vmem:[#allocation5 + $0x104] sm:$0xf]
    %v151 = vld [vmem:[#allocation5 + $0x108] sm:$0xf]
    %v152 = vld [vmem:[#allocation5 + $0x10c] sm:$0xf]
    %v153 = vld [vmem:[#allocation5 + $0x110] sm:$0xf]
    %v154 = vld [vmem:[#allocation5 + $0x114] sm:$0xf]
    %v155 = vld [vmem:[#allocation5 + $0x118] sm:$0xf]
    %v156 = vld [vmem:[#allocation5 + $0x11c] sm:$0xf]
    %v157 = vld [vmem:[#allocation5 + $0x120] sm:$0xf]
    %v158 = vld [vmem:[#allocation5 + $0x124] sm:$0xf]
    %v159 = vld [vmem:[#allocation5 + $0x128] sm:$0xf]
    %v160 = vld [vmem:[#allocation5 + $0x12c] sm:$0xf]
    %v161 = vld [vmem:[#allocation5 + $0x130] sm:$0xf]
    %v162 = vld [vmem:[#allocation5 + $0x134] sm:$0xf]
    %v163 = vld [vmem:[#allocation5 + $0x138] sm:$0xf]
    %v164 = vld [vmem:[#allocation5 + $0x13c] sm:$0xf]
    %v165 = vld [vmem:[#allocation5 + $0x140] sm:$0xf]
    %v166 = vld [vmem:[#allocation5 + $0x144] sm:$0xf]
    %v167 = vld [vmem:[#allocation5 + $0x148] sm:$0xf]
    %v168 = vld [vmem:[#allocation5 + $0x14c] sm:$0xf]
    %v169 = vld [vmem:[#allocation5 + $0x150] sm:$0xf]
    %v170 = vld [vmem:[#allocation5 + $0x154] sm:$0xf]
    %v171 = vld [vmem:[#allocation5 + $0x158] sm:$0xf]
    %v172 = vld [vmem:[#allocation5 + $0x15c] sm:$0xf]
    %v173 = vld [vmem:[#allocation5 + $0x160] sm:$0xf]
    %v174 = vld [vmem:[#allocation5 + $0x164] sm:$0xf]
    %v175 = vld [vmem:[#allocation5 + $0x168] sm:$0xf]
    %v176 = vld [vmem:[#allocation5 + $0x16c] sm:$0xf]
    %v177 = vld [vmem:[#allocation5 + $0x170] sm:$0xf]
    %v178 = vld [vmem:[#allocation5 + $0x174] sm:$0xf]
    %v179 = vld [vmem:[#allocation5 + $0x178] sm:$0xf]
    %v180 = vld [vmem:[#allocation5 + $0x17c] sm:$0xf]
    %v181 = vld [vmem:[#allocation5 + $0x180] sm:$0xf]
    %v182 = vld [vmem:[#allocation5 + $0x184] sm:$0xf]
    %v183 = vld [vmem:[#allocation5 + $0x188] sm:$0xf]
    %v184 = vld [vmem:[#allocation5 + $0x18c] sm:$0xf]
    %v185 = vld [vmem:[%s2] sm:$0x1]
    %v187 = vlaneseq
    %v188 = vshrl.u32 %v187, 7
    %v189 = vsub.s32 0, %v188
    %v190 = vrot.slane %v185, %v189
    %v196 = vunpack.c.l.b16 %v81
    %v197 = vunpack.c.h.b16 %v81
    %v198 = vunpack.c.l.b16 %v82
    %v199 = vunpack.c.h.b16 %v82
    %v200 = vunpack.c.l.b16 %v83
    %v201 = vunpack.c.h.b16 %v83
    %v202 = vunpack.c.l.b16 %v84
    %v203 = vpack.c.b16 %v196, %v196
    %v204 = vpack.c.b16 %v197, %v197
    %v205 = vpack.c.b16 %v198, %v198
    %v206 = vpack.c.b16 %v199, %v199
    %v207 = vpack.c.b16 %v200, %v200
    %v208 = vpack.c.b16 %v201, %v201
    %v209 = vpack.c.b16 %v202, %v202
    %v316 = vunpack.c.l.b16 %v85
    %v317 = vunpack.c.l.b16 %v86
    %v318 = vunpack.c.l.b16 %v87
    %v319 = vunpack.c.l.b16 %v88
    %v320 = vunpack.c.l.b16 %v89
    %v321 = vunpack.c.l.b16 %v90
    %v322 = vunpack.c.l.b16 %v91
    %v323 = vunpack.c.l.b16 %v92
    %v324 = vunpack.c.l.b16 %v93
    %v325 = vunpack.c.l.b16 %v94
    %v326 = vunpack.c.l.b16 %v95
    %v327 = vunpack.c.l.b16 %v96
    %v328 = vunpack.c.l.b16 %v97
    %v329 = vunpack.c.l.b16 %v98
    %v330 = vunpack.c.l.b16 %v99
    %v331 = vunpack.c.l.b16 %v100
    %v332 = vunpack.c.l.b16 %v101
    %v333 = vunpack.c.l.b16 %v102
    %v334 = vunpack.c.l.b16 %v103
    %v335 = vunpack.c.l.b16 %v104
    %v336 = vunpack.c.l.b16 %v105
    %v337 = vunpack.c.l.b16 %v106
    %v338 = vunpack.c.l.b16 %v107
    %v339 = vunpack.c.l.b16 %v108
    %v340 = vunpack.c.l.b16 %v109
    %v341 = vunpack.c.l.b16 %v110
    %v342 = vunpack.c.l.b16 %v111
    %v343 = vunpack.c.l.b16 %v112
    %v344 = vunpack.c.l.b16 %v113
    %v345 = vunpack.c.l.b16 %v114
    %v346 = vunpack.c.l.b16 %v115
    %v347 = vunpack.c.l.b16 %v116
    %v348 = vunpack.c.l.b16 %v117
    %v349 = vunpack.c.l.b16 %v118
    %v350 = vunpack.c.l.b16 %v119
    %v351 = vunpack.c.l.b16 %v120
    %v352 = vunpack.c.l.b16 %v121
    %v353 = vunpack.c.l.b16 %v122
    %v354 = vunpack.c.l.b16 %v123
    %v355 = vunpack.c.l.b16 %v124
    %v356 = vunpack.c.l.b16 %v125
    %v357 = vunpack.c.l.b16 %v126
    %v358 = vunpack.c.l.b16 %v127
    %v359 = vunpack.c.l.b16 %v128
    %v360 = vunpack.c.l.b16 %v129
    %v361 = vunpack.c.l.b16 %v130
    %v362 = vunpack.c.l.b16 %v131
    %v363 = vunpack.c.l.b16 %v132
    %v364 = vunpack.c.l.b16 %v133
    %v365 = vunpack.c.l.b16 %v134
    %v366 = vunpack.c.l.b16 %v135
    %v367 = vunpack.c.l.b16 %v136
    %v368 = vunpack.c.l.b16 %v137
    %v369 = vunpack.c.l.b16 %v138
    %v370 = vunpack.c.l.b16 %v139
    %v371 = vunpack.c.l.b16 %v140
    %v372 = vunpack.c.l.b16 %v141
    %v373 = vunpack.c.l.b16 %v142
    %v374 = vunpack.c.l.b16 %v143
    %v375 = vunpack.c.l.b16 %v144
    %v376 = vunpack.c.l.b16 %v145
    %v377 = vunpack.c.l.b16 %v146
    %v378 = vunpack.c.l.b16 %v147
    %v379 = vunpack.c.l.b16 %v148
    %v380 = vunpack.c.l.b16 %v149
    %v381 = vunpack.c.l.b16 %v150
    %v382 = vunpack.c.l.b16 %v151
    %v383 = vunpack.c.l.b16 %v152
    %v384 = vunpack.c.l.b16 %v153
    %v385 = vunpack.c.l.b16 %v154
    %v386 = vunpack.c.l.b16 %v155
    %v387 = vunpack.c.l.b16 %v156
    %v388 = vunpack.c.l.b16 %v157
    %v389 = vunpack.c.l.b16 %v158
    %v390 = vunpack.c.l.b16 %v159
    %v391 = vunpack.c.l.b16 %v160
    %v392 = vunpack.c.l.b16 %v161
    %v393 = vunpack.c.l.b16 %v162
    %v394 = vunpack.c.l.b16 %v163
    %v395 = vunpack.c.l.b16 %v164
    %v396 = vunpack.c.l.b16 %v165
    %v397 = vunpack.c.l.b16 %v166
    %v398 = vunpack.c.l.b16 %v167
    %v399 = vunpack.c.l.b16 %v168
    %v400 = vunpack.c.l.b16 %v169
    %v401 = vunpack.c.l.b16 %v170
    %v402 = vunpack.c.l.b16 %v171
    %v403 = vunpack.c.l.b16 %v172
    %v404 = vunpack.c.l.b16 %v173
    %v405 = vunpack.c.l.b16 %v174
    %v406 = vunpack.c.l.b16 %v175
    %v407 = vunpack.c.l.b16 %v176
    %v408 = vunpack.c.l.b16 %v177
    %v409 = vunpack.c.l.b16 %v178
    %v410 = vunpack.c.l.b16 %v179
    %v411 = vunpack.c.l.b16 %v180
    %v412 = vunpack.c.l.b16 %v181
    %v413 = vunpack.c.l.b16 %v182
    %v414 = vunpack.c.l.b16 %v183
    %v415 = vunpack.c.l.b16 %v184
    %v416 = vpack.c.b16 %v317, %v316
    %v417 = vpack.c.b16 %v319, %v318
    %v418 = vpack.c.b16 %v321, %v320
    %v419 = vpack.c.b16 %v323, %v322
    %v420 = vpack.c.b16 %v325, %v324
    %v421 = vpack.c.b16 %v327, %v326
    %v422 = vpack.c.b16 %v329, %v328
    %v423 = vpack.c.b16 %v331, %v330
    %v424 = vpack.c.b16 %v333, %v332
    %v425 = vpack.c.b16 %v335, %v334
    %v426 = vpack.c.b16 %v337, %v336
    %v427 = vpack.c.b16 %v339, %v338
    %v428 = vpack.c.b16 %v341, %v340
    %v429 = vpack.c.b16 %v343, %v342
    %v430 = vpack.c.b16 %v345, %v344
    %v431 = vpack.c.b16 %v347, %v346
    %v432 = vpack.c.b16 %v349, %v348
    %v433 = vpack.c.b16 %v351, %v350
    %v434 = vpack.c.b16 %v353, %v352
    %v435 = vpack.c.b16 %v355, %v354
    %v436 = vpack.c.b16 %v357, %v356
    %v437 = vpack.c.b16 %v359, %v358
    %v438 = vpack.c.b16 %v361, %v360
    %v439 = vpack.c.b16 %v363, %v362
    %v440 = vpack.c.b16 %v365, %v364
    %v441 = vpack.c.b16 %v367, %v366
    %v442 = vpack.c.b16 %v369, %v368
    %v443 = vpack.c.b16 %v371, %v370
    %v444 = vpack.c.b16 %v373, %v372
    %v445 = vpack.c.b16 %v375, %v374
    %v446 = vpack.c.b16 %v377, %v376
    %v447 = vpack.c.b16 %v379, %v378
    %v448 = vpack.c.b16 %v381, %v380
    %v449 = vpack.c.b16 %v383, %v382
    %v450 = vpack.c.b16 %v385, %v384
    %v451 = vpack.c.b16 %v387, %v386
    %v452 = vpack.c.b16 %v389, %v388
    %v453 = vpack.c.b16 %v391, %v390
    %v454 = vpack.c.b16 %v393, %v392
    %v455 = vpack.c.b16 %v395, %v394
    %v456 = vpack.c.b16 %v397, %v396
    %v457 = vpack.c.b16 %v399, %v398
    %v458 = vpack.c.b16 %v401, %v400
    %v459 = vpack.c.b16 %v403, %v402
    %v460 = vpack.c.b16 %v405, %v404
    %v461 = vpack.c.b16 %v407, %v406
    %v462 = vpack.c.b16 %v409, %v408
    %v463 = vpack.c.b16 %v411, %v410
    %v464 = vpack.c.b16 %v413, %v412
    %v465 = vpack.c.b16 %v415, %v414
    %vm516 = vcmask 261120
    %v518 = vsel %vm516, %v209, 0
    %520 = vmatprep.subr.bf16.mxu0 0
    %521 = vmatpush1.bf16.msra.mxu0 %v416
    %522 = vmatprep.subr.bf16.mxu0 0
    %523 = vmatpush1.bf16.msra.mxu0 %v417
    %524 = vmatprep.subr.bf16.mxu0 0
    %525 = vmatpush1.bf16.msra.mxu0 %v418
    %526 = vmatprep.subr.bf16.mxu0 0
    %527 = vmatpush1.bf16.msra.mxu0 %v419
    %528 = vmatprep.subr.bf16.mxu0 0
    %529 = vmatpush1.bf16.msra.mxu0 %v420
    %530 = vmatprep.subr.bf16.mxu0 0
    %531 = vmatpush1.bf16.msra.mxu0 %v421
    %532 = vmatprep.subr.bf16.mxu0 0
    %533 = vmatpush1.bf16.msra.mxu0 %v422
    %534 = vmatprep.subr.bf16.mxu0 0
    %535 = vmatpush1.bf16.msra.mxu0 %v423
    %536 = vmatprep.subr.bf16.mxu0 0
    %537 = vmatpush1.bf16.msra.mxu0 %v424
    %538 = vmatprep.subr.bf16.mxu0 0
    %539 = vmatpush1.bf16.msra.mxu0 %v425
    %540 = vmatprep.subr.bf16.mxu0 0
    %541 = vmatpush1.bf16.msra.mxu0 %v426
    %542 = vmatprep.subr.bf16.mxu0 0
    %543 = vmatpush1.bf16.msra.mxu0 %v427
    %544 = vmatprep.subr.bf16.mxu0 0
    %545 = vmatpush1.bf16.msra.mxu0 %v428
    %546 = vmatprep.subr.bf16.mxu0 0
    %547 = vmatpush1.bf16.msra.mxu0 %v429
    %548 = vmatprep.subr.bf16.mxu0 0
    %549 = vmatpush1.bf16.msra.mxu0 %v430
    %550 = vmatprep.subr.bf16.mxu0 0
    %551 = vmatpush1.bf16.msra.mxu0 %v431
    %552 = vmatprep.mubr.bf16.mxu0 %v204
    %553 = vmatmul.mubr.bf16.gmra.mrb[0].mxu0 %v203
    %v554 = vpop.f32.mrb[0].mxu0
    %v555 = vadd.f32 %v190, %v554
    %v556 = vpop.f32.mrb[0].mxu0
    %v557 = vpop.f32.mrb[0].mxu0
    %v558 = vpop.f32.mrb[0].mxu0
    %559 = vdwg.mxu0
    %560 = vmatprep.subr.bf16.mxu0 0
    %561 = vmatpush1.bf16.msra.mxu0 %v432
    %562 = vmatprep.subr.bf16.mxu0 0
    %563 = vmatpush1.bf16.msra.mxu0 %v433
    %564 = vmatprep.subr.bf16.mxu0 0
    %565 = vmatpush1.bf16.msra.mxu0 %v434
    %566 = vmatprep.subr.bf16.mxu0 0
    %567 = vmatpush1.bf16.msra.mxu0 %v435
    %568 = vmatprep.subr.bf16.mxu0 0
    %569 = vmatpush1.bf16.msra.mxu0 %v436
    %570 = vmatprep.subr.bf16.mxu0 0
    %571 = vmatpush1.bf16.msra.mxu0 %v437
    %572 = vmatprep.subr.bf16.mxu0 0
    %573 = vmatpush1.bf16.msra.mxu0 %v438
    %574 = vmatprep.subr.bf16.mxu0 0
    %575 = vmatpush1.bf16.msra.mxu0 %v439
    %576 = vmatprep.subr.bf16.mxu0 0
    %577 = vmatpush1.bf16.msra.mxu0 %v440
    %578 = vmatprep.subr.bf16.mxu0 0
    %579 = vmatpush1.bf16.msra.mxu0 %v441
    %580 = vmatprep.subr.bf16.mxu0 0
    %581 = vmatpush1.bf16.msra.mxu0 %v442
    %582 = vmatprep.subr.bf16.mxu0 0
    %583 = vmatpush1.bf16.msra.mxu0 %v443
    %584 = vmatprep.subr.bf16.mxu0 0
    %585 = vmatpush1.bf16.msra.mxu0 %v444
    %586 = vmatprep.subr.bf16.mxu0 0
    %587 = vmatpush1.bf16.msra.mxu0 %v445
    %588 = vmatprep.subr.bf16.mxu0 0
    %589 = vmatpush1.bf16.msra.mxu0 %v446
    %590 = vmatprep.subr.bf16.mxu0 0
    %591 = vmatpush1.bf16.msra.mxu0 %v447
    %592 = vmatprep.mubr.bf16.mxu0 %v206
    %593 = vmatmul.mubr.bf16.gmra.mrb[0].mxu0 %v205
    %v594 = vpop.f32.mrb[0].mxu0
    %v595 = vadd.f32 %v555, %v594
    %v596 = vpop.f32.mrb[0].mxu0
    %v597 = vpop.f32.mrb[0].mxu0
    %v598 = vpop.f32.mrb[0].mxu0
    %599 = vdwg.mxu0
    %600 = vmatprep.subr.bf16.mxu0 0
    %601 = vmatpush1.bf16.msra.mxu0 %v448
    %602 = vmatprep.subr.bf16.mxu0 0
    %603 = vmatpush1.bf16.msra.mxu0 %v449
    %604 = vmatprep.subr.bf16.mxu0 0
    %605 = vmatpush1.bf16.msra.mxu0 %v450
    %606 = vmatprep.subr.bf16.mxu0 0
    %607 = vmatpush1.bf16.msra.mxu0 %v451
    %608 = vmatprep.subr.bf16.mxu0 0
    %609 = vmatpush1.bf16.msra.mxu0 %v452
    %610 = vmatprep.subr.bf16.mxu0 0
    %611 = vmatpush1.bf16.msra.mxu0 %v453
    %612 = vmatprep.subr.bf16.mxu0 0
    %613 = vmatpush1.bf16.msra.mxu0 %v454
    %614 = vmatprep.subr.bf16.mxu0 0
    %615 = vmatpush1.bf16.msra.mxu0 %v455
    %616 = vmatprep.subr.bf16.mxu0 0
    %617 = vmatpush1.bf16.msra.mxu0 %v456
    %618 = vmatprep.subr.bf16.mxu0 0
    %619 = vmatpush1.bf16.msra.mxu0 %v457
    %620 = vmatprep.subr.bf16.mxu0 0
    %621 = vmatpush1.bf16.msra.mxu0 %v458
    %622 = vmatprep.subr.bf16.mxu0 0
    %623 = vmatpush1.bf16.msra.mxu0 %v459
    %624 = vmatprep.subr.bf16.mxu0 0
    %625 = vmatpush1.bf16.msra.mxu0 %v460
    %626 = vmatprep.subr.bf16.mxu0 0
    %627 = vmatpush1.bf16.msra.mxu0 %v461
    %628 = vmatprep.subr.bf16.mxu0 0
    %629 = vmatpush1.bf16.msra.mxu0 %v462
    %630 = vmatprep.subr.bf16.mxu0 0
    %631 = vmatpush1.bf16.msra.mxu0 %v463
    %632 = vmatprep.mubr.bf16.mxu0 %v208
    %633 = vmatmul.mubr.bf16.gmra.mrb[0].mxu0 %v207
    %v634 = vpop.f32.mrb[0].mxu0
    %v635 = vadd.f32 %v595, %v634
    %v636 = vpop.f32.mrb[0].mxu0
    %v637 = vpop.f32.mrb[0].mxu0
    %v638 = vpop.f32.mrb[0].mxu0
    %639 = vdwg.mxu0
    %640 = vmatprep.subr.bf16.mxu0 0
    %641 = vmatpush1.bf16.msra.mxu0 %v464
    %642 = vmatprep.subr.bf16.mxu0 0
    %643 = vmatpush1.bf16.msra.mxu0 %v465
    %644 = vmatprep.subr.bf16.mxu0 0
    %645 = vmatpush1.bf16.msra.mxu0 0
    %646 = vmatprep.subr.bf16.mxu0 0
    %647 = vmatpush1.bf16.msra.mxu0 0
    %648 = vmatprep.subr.bf16.mxu0 0
    %649 = vmatpush1.bf16.msra.mxu0 0
    %650 = vmatprep.subr.bf16.mxu0 0
    %651 = vmatpush1.bf16.msra.mxu0 0
    %652 = vmatprep.subr.bf16.mxu0 0
    %653 = vmatpush1.bf16.msra.mxu0 0
    %654 = vmatprep.subr.bf16.mxu0 0
    %655 = vmatpush1.bf16.msra.mxu0 0
    %656 = vmatprep.subr.bf16.mxu0 0
    %657 = vmatpush1.bf16.msra.mxu0 0
    %658 = vmatprep.subr.bf16.mxu0 0
    %659 = vmatpush1.bf16.msra.mxu0 0
    %660 = vmatprep.subr.bf16.mxu0 0
    %661 = vmatpush1.bf16.msra.mxu0 0
    %662 = vmatprep.subr.bf16.mxu0 0
    %663 = vmatpush1.bf16.msra.mxu0 0
    %664 = vmatprep.subr.bf16.mxu0 0
    %665 = vmatpush1.bf16.msra.mxu0 0
    %666 = vmatprep.subr.bf16.mxu0 0
    %667 = vmatpush1.bf16.msra.mxu0 0
    %668 = vmatprep.subr.bf16.mxu0 0
    %669 = vmatpush1.bf16.msra.mxu0 0
    %670 = vmatprep.subr.bf16.mxu0 0
    %671 = vmatpush1.bf16.msra.mxu0 0
    %672 = vmatprep.mubr.bf16.mxu0 0
    %673 = vmatmul.mubr.bf16.gmra.mrb[0].mxu0 %v518
    %v674 = vpop.f32.mrb[0].mxu0
    %v675 = vadd.f32 %v635, %v674
    %v676 = vpop.f32.mrb[0].mxu0
    %v677 = vpop.f32.mrb[0].mxu0
    %v678 = vpop.f32.mrb[0].mxu0
    %679 = vdwg.mxu0
    %v680 = vmax.f32 %v675, 0.0
    %v681 = vpack.c.bf16 %v680, %v680
    %v682 = vld [vmem:[#allocation7] sm:$0xf]
    %v683 = vld [vmem:[#allocation7 + $0x4] sm:$0xf]
    %v684 = vld [vmem:[#allocation7 + $0x8] sm:$0xf]
    %v685 = vld [vmem:[#allocation7 + $0xc] sm:$0xf]
    %v686 = vld [vmem:[#allocation7 + $0x10] sm:$0xf]
    %v687 = vld [vmem:[#allocation7 + $0x14] sm:$0xf]
    %v688 = vld [vmem:[#allocation7 + $0x18] sm:$0xf]
    %v689 = vld [vmem:[#allocation7 + $0x1c] sm:$0xf]
    %v690 = vld [vmem:[#allocation7 + $0x20] sm:$0xf]
    %v691 = vld [vmem:[#allocation7 + $0x24] sm:$0xf]
    %v692 = vld [vmem:[#allocation7 + $0x28] sm:$0xf]
    %v693 = vld [vmem:[#allocation7 + $0x2c] sm:$0xf]
    %v694 = vld [vmem:[#allocation7 + $0x30] sm:$0xf]
    %v695 = vld [vmem:[#allocation7 + $0x34] sm:$0xf]
    %v696 = vld [vmem:[#allocation7 + $0x38] sm:$0xf]
    %v697 = vld [vmem:[#allocation7 + $0x3c] sm:$0xf]
    %v698 = vld [vmem:[%s4] sm:$0x1]
    %v700 = vlaneseq
    %v701 = vshrl.u32 %v700, 7
    %v702 = vsub.s32 0, %v701
    %v703 = vrot.slane %v698, %v702
    %v721 = vunpack.c.l.b16 %v682
    %v722 = vunpack.c.l.b16 %v683
    %v723 = vunpack.c.l.b16 %v684
    %v724 = vunpack.c.l.b16 %v685
    %v725 = vunpack.c.l.b16 %v686
    %v726 = vunpack.c.l.b16 %v687
    %v727 = vunpack.c.l.b16 %v688
    %v728 = vunpack.c.l.b16 %v689
    %v729 = vunpack.c.l.b16 %v690
    %v730 = vunpack.c.l.b16 %v691
    %v731 = vunpack.c.l.b16 %v692
    %v732 = vunpack.c.l.b16 %v693
    %v733 = vunpack.c.l.b16 %v694
    %v734 = vunpack.c.l.b16 %v695
    %v735 = vunpack.c.l.b16 %v696
    %v736 = vunpack.c.l.b16 %v697
    %v737 = vpack.c.b16 %v722, %v721
    %v738 = vpack.c.b16 %v724, %v723
    %v739 = vpack.c.b16 %v726, %v725
    %v740 = vpack.c.b16 %v728, %v727
    %v741 = vpack.c.b16 %v730, %v729
    %v742 = vpack.c.b16 %v732, %v731
    %v743 = vpack.c.b16 %v734, %v733
    %v744 = vpack.c.b16 %v736, %v735
    %753 = vmatprep.subr.bf16.mxu0 0
    %754 = vmatpush1.bf16.msra.mxu0 %v737
    %755 = vmatprep.subr.bf16.mxu0 0
    %756 = vmatpush1.bf16.msra.mxu0 %v738
    %757 = vmatprep.subr.bf16.mxu0 0
    %758 = vmatpush1.bf16.msra.mxu0 %v739
    %759 = vmatprep.subr.bf16.mxu0 0
    %760 = vmatpush1.bf16.msra.mxu0 %v740
    %761 = vmatprep.subr.bf16.mxu0 0
    %762 = vmatpush1.bf16.msra.mxu0 %v741
    %763 = vmatprep.subr.bf16.mxu0 0
    %764 = vmatpush1.bf16.msra.mxu0 %v742
    %765 = vmatprep.subr.bf16.mxu0 0
    %766 = vmatpush1.bf16.msra.mxu0 %v743
    %767 = vmatprep.subr.bf16.mxu0 0
    %768 = vmatpush1.bf16.msra.mxu0 %v744
    %769 = vmatprep.subr.bf16.mxu0 0
    %770 = vmatpush1.bf16.msra.mxu0 0
    %771 = vmatprep.subr.bf16.mxu0 0
    %772 = vmatpush1.bf16.msra.mxu0 0
    %773 = vmatprep.subr.bf16.mxu0 0
    %774 = vmatpush1.bf16.msra.mxu0 0
    %775 = vmatprep.subr.bf16.mxu0 0
    %776 = vmatpush1.bf16.msra.mxu0 0
    %777 = vmatprep.subr.bf16.mxu0 0
    %778 = vmatpush1.bf16.msra.mxu0 0
    %779 = vmatprep.subr.bf16.mxu0 0
    %780 = vmatpush1.bf16.msra.mxu0 0
    %781 = vmatprep.subr.bf16.mxu0 0
    %782 = vmatpush1.bf16.msra.mxu0 0
    %783 = vmatprep.subr.bf16.mxu0 0
    %784 = vmatpush1.bf16.msra.mxu0 0
    %785 = vmatprep.mubr.bf16.mxu0 0
    %786 = vmatmul.mubr.bf16.gmra.mrb[0].mxu0 %v681
    %v787 = vpop.f32.mrb[0].mxu0
    %v788 = vadd.f32 %v703, %v787
    %v789 = vpop.f32.mrb[0].mxu0
    %v790 = vpop.f32.mrb[0].mxu0
    %v791 = vpop.f32.mrb[0].mxu0
    %792 = vdwg.mxu0
    %v793 = vmax.f32 %v788, 0.0
    %v794 = vpack.c.bf16 %v793, %v793
    %v795 = vld [vmem:[#allocation8] sm:$0xf]
    %v796 = vld [vmem:[#allocation8 + $0x4] sm:$0xf]
    %v797 = vld [vmem:[#allocation8 + $0x8] sm:$0xf]
    %v798 = vld [vmem:[#allocation8 + $0xc] sm:$0xf]
    %v799 = vld [vmem:[#allocation8 + $0x10] sm:$0xf]
    %v800 = vld [vmem:[#allocation8 + $0x14] sm:$0xf]
    %v801 = vld [vmem:[#allocation8 + $0x18] sm:$0xf]
    %v802 = vld [vmem:[#allocation8 + $0x1c] sm:$0xf]
    %v803 = vld [vmem:[#allocation8 + $0x20] sm:$0xf]
    %v804 = vld [vmem:[#allocation8 + $0x24] sm:$0xf]
    %v805 = vld [vmem:[#allocation8 + $0x28] sm:$0xf]
    %v806 = vld [vmem:[#allocation8 + $0x2c] sm:$0xf]
    %v807 = vld [vmem:[#allocation8 + $0x30] sm:$0xf]
    %v808 = vld [vmem:[#allocation8 + $0x34] sm:$0xf]
    %v809 = vld [vmem:[#allocation8 + $0x38] sm:$0xf]
    %v810 = vld [vmem:[#allocation8 + $0x3c] sm:$0xf]
    %v811 = vld [vmem:[%s6] sm:$0x1]
    %v813 = vlaneseq
    %v814 = vshrl.u32 %v813, 7
    %v815 = vsub.s32 0, %v814
    %v816 = vrot.slane %v811, %v815
    %v834 = vunpack.c.l.b16 %v795
    %v835 = vunpack.c.l.b16 %v796
    %v836 = vunpack.c.l.b16 %v797
    %v837 = vunpack.c.l.b16 %v798
    %v838 = vunpack.c.l.b16 %v799
    %v839 = vunpack.c.l.b16 %v800
    %v840 = vunpack.c.l.b16 %v801
    %v841 = vunpack.c.l.b16 %v802
    %v842 = vunpack.c.l.b16 %v803
    %v843 = vunpack.c.l.b16 %v804
    %v844 = vunpack.c.l.b16 %v805
    %v845 = vunpack.c.l.b16 %v806
    %v846 = vunpack.c.l.b16 %v807
    %v847 = vunpack.c.l.b16 %v808
    %v848 = vunpack.c.l.b16 %v809
    %v849 = vunpack.c.l.b16 %v810
    %v850 = vpack.c.b16 %v835, %v834
    %v851 = vpack.c.b16 %v837, %v836
    %v852 = vpack.c.b16 %v839, %v838
    %v853 = vpack.c.b16 %v841, %v840
    %v854 = vpack.c.b16 %v843, %v842
    %v855 = vpack.c.b16 %v845, %v844
    %v856 = vpack.c.b16 %v847, %v846
    %v857 = vpack.c.b16 %v849, %v848
    %866 = vmatprep.subr.bf16.mxu0 0
    %867 = vmatpush1.bf16.msra.mxu0 %v850
    %868 = vmatprep.subr.bf16.mxu0 0
    %869 = vmatpush1.bf16.msra.mxu0 %v851
    %870 = vmatprep.subr.bf16.mxu0 0
    %871 = vmatpush1.bf16.msra.mxu0 %v852
    %872 = vmatprep.subr.bf16.mxu0 0
    %873 = vmatpush1.bf16.msra.mxu0 %v853
    %874 = vmatprep.subr.bf16.mxu0 0
    %875 = vmatpush1.bf16.msra.mxu0 %v854
    %876 = vmatprep.subr.bf16.mxu0 0
    %877 = vmatpush1.bf16.msra.mxu0 %v855
    %878 = vmatprep.subr.bf16.mxu0 0
    %879 = vmatpush1.bf16.msra.mxu0 %v856
    %880 = vmatprep.subr.bf16.mxu0 0
    %881 = vmatpush1.bf16.msra.mxu0 %v857
    %882 = vmatprep.subr.bf16.mxu0 0
    %883 = vmatpush1.bf16.msra.mxu0 0
    %884 = vmatprep.subr.bf16.mxu0 0
    %885 = vmatpush1.bf16.msra.mxu0 0
    %886 = vmatprep.subr.bf16.mxu0 0
    %887 = vmatpush1.bf16.msra.mxu0 0
    %888 = vmatprep.subr.bf16.mxu0 0
    %889 = vmatpush1.bf16.msra.mxu0 0
    %890 = vmatprep.subr.bf16.mxu0 0
    %891 = vmatpush1.bf16.msra.mxu0 0
    %892 = vmatprep.subr.bf16.mxu0 0
    %893 = vmatpush1.bf16.msra.mxu0 0
    %894 = vmatprep.subr.bf16.mxu0 0
    %895 = vmatpush1.bf16.msra.mxu0 0
    %896 = vmatprep.subr.bf16.mxu0 0
    %897 = vmatpush1.bf16.msra.mxu0 0
    %898 = vmatprep.mubr.bf16.mxu0 0
    %899 = vmatmul.mubr.bf16.gmra.mrb[0].mxu0 %v794
    %v900 = vpop.f32.mrb[0].mxu0
    %v901 = vadd.f32 %v816, %v900
    %v902 = vpop.f32.mrb[0].mxu0
    %v903 = vpop.f32.mrb[0].mxu0
    %v904 = vpop.f32.mrb[0].mxu0
    %905 = vdwg.mxu0
    %906 = vmax.xlane.f32.xlu0 %v901
    %v907 = vpop.xlane.xlu0 %906
    %v908 = vsub.f32 %v901, %v907
    %v909 = vmul.f32 %v908, 1.442695
    %v910 = vpow.pop %v909
    %911 = vadd.xlane.f32.xlu0 %v910
    %v912 = vpop.xlane.xlu0 %911
    %v913 = vlog2.pop %v912
    %v914 = vmul.f32 %v913, 0.6931472
    %v915 = vsub.f32 %v908, %v914
    %916 = vst [vmem:[#allocation10] sm:$0xff] %v915
    // Predicated region
    $region46: #{tpu_custom_call.1} parent=1 // pred_check
      _
    $region47: #{tpu_custom_call.1} parent=1 // pred_check_branch
      %918 = sbr.rel (0) target = $region49
    $region48: #{tpu_custom_call.1} parent=1 // pred_region
      %s920 = ssub.s32 128, 128
      %921 = vsyncadd [#allocation4], %s920
      %s923 = sshll.u32 [#allocation10], 4
      %s924 = int_to_ptr.vmem [resolvable:$true] %s923
      %926 = dma.vmem_to_hbm [thread:$0]  %s924, 128, %s7, [#allocation4]
    $region49: #{tpu_custom_call.1} parent=1 // pred_fallthru
      _
    // Predicated region
    $region50: #{tpu_custom_call.1} parent=1 // pred_check
      _
    $region51: #{tpu_custom_call.1} parent=1 // pred_check_branch
      %928 = sbr.rel (0) target = $region53
    $region52: #{tpu_custom_call.1} parent=1 // pred_region
      %929 = dma.done [#allocation4], 128
    $region53: #{tpu_custom_call.1} parent=1 // pred_fallthru
      _
    %930 = vsyncpa [#allocation3], 1
    %931 = vsyncpa [#allocation6], 1
    %932 = vsyncpa [#allocation9], 1
    %933 = vsyncpa [#allocation4], 1

</llo_original>
